<compile_context>
chip_gen: v7x
topology: tpu7x:2x2x1
jax: 0.10.0
libtpu: 0.0.40
codegen_flags: <defaults>
</compile_context>

<pallas_src>
import functools

import jax
import jax.numpy as jnp
from jax.experimental import pallas as pl
from jax.experimental.pallas import tpu as pltpu

_PDIST_EPS = 1e-6  # PyTorch PairwiseDistance default eps


def _triplet_kernel(a_ref, p_ref, n_ref, out_ref, acc_ref, *, margin, batch,
                    block_rows, tiles_per_shard, need_mask):
    c = pl.program_id(0)  # shard (parallel; maps to a TensorCore on v7x)
    t = pl.program_id(1)  # tile within shard (sequential reduction axis)

    @pl.when(t == 0)
    def _init():
        acc_ref[0] = jnp.float32(0.0)

    # Difference in native input dtype (bf16 VALU on v6e/v7x); upcast only the
    # two difference tensors to f32 -> fewer full-tile f32 temporaries.
    a = a_ref[...]
    dp = (a - p_ref[...]).astype(jnp.float32) + _PDIST_EPS
    dn = (a - n_ref[...]).astype(jnp.float32) + _PDIST_EPS

    # PairwiseDistance(p=2): row-wise L2 norm (XLU reduce, EUP sqrt).
    pos_dist = jnp.sqrt(jnp.sum(dp * dp, axis=-1, keepdims=True))  # (TB, 1)
    neg_dist = jnp.sqrt(jnp.sum(dn * dn, axis=-1, keepdims=True))  # (TB, 1)

    hinge = jnp.maximum(jnp.float32(margin) + pos_dist - neg_dist, 0.0)

    if need_mask:
        # Mask rows past the true batch (ragged last tile / padded shard
        # tiles). Only emitted when the batch does not divide evenly.
        global_tile = c * tiles_per_shard + t
        row = (jax.lax.broadcasted_iota(jnp.int32, hinge.shape, 0)
               + global_tile * block_rows)
        hinge = jnp.where(row < batch, hinge, 0.0)

    acc_ref[0] += jnp.sum(hinge)

    @pl.when(t == pl.num_programs(1) - 1)
    def _finalize():
        # One unmasked, lane-dense (8,128) store per shard; wrapper reads
        # element [0, 0] of each shard's tile.
        out_ref[...] = jnp.full(out_ref.shape, acc_ref[0], dtype=jnp.float32)


def _vmem_limit_bytes():
    """~3/4 of physical VMEM: 96 MiB on v5e/v6e, 48 MiB on v7x."""
    cap = 64 * 1024 * 1024  # conservative fallback (v7x physical)
    try:
        cap = int(getattr(pltpu.get_tpu_info(), "vmem_capacity_bytes", cap))
    except Exception:
        pass
    return (cap * 3) // 4


def triplet_loss(anchor, positive, negative, margin, *, block_rows=None,
                 num_shards=2):
    """Scalar triplet hinge loss with margin, mean over the batch."""
    B, D = anchor.shape
    itemsize = jnp.dtype(anchor.dtype).itemsize

    vmem_limit = _vmem_limit_bytes()

    # dtype-aware sublane rounding: f32 -> 8 rows, bf16 -> 16, int8/fp8 -> 32.
    sublane_mult = 8 * max(1, 4 // itemsize)

    if block_rows is None:
        # ~1/10 of the scoped VMEM limit per input tile: 3 inputs x 2 pipeline
        # buffers = 60% of the limit for DMA buffers, the rest is headroom for
        # the f32 difference temporaries and compiler scratch.
        tile_budget = max(1, vmem_limit // 10)
        rows = max(1, tile_budget // max(1, D * itemsize))
        tb = min(B, rows)
    else:
        tb = min(int(block_rows), B)
    if tb < B:
        tb = max(sublane_mult, (tb // sublane_mult) * sublane_mult)
        if tb >= B:
            tb = B

    # TODO(synk): for small D (< 128) a lane-dense repack (fold rows into the
    # lane dim + segmented reduction) would avoid 128-lane padding of each row.

    num_tiles = pl.cdiv(B, tb)
    shards = max(1, min(int(num_shards), num_tiles))
    tiles_per_shard = pl.cdiv(num_tiles, shards)
    need_mask = (B % tb != 0) or (shards * tiles_per_shard != num_tiles)

    def in_idx(c, t):
        # Clamp padded shard tiles onto the last valid block; their rows are
        # masked out in-kernel, so the (repeated) data they read is harmless.
        return (jnp.minimum(c * tiles_per_shard + t, num_tiles - 1), 0)

    kernel = functools.partial(
        _triplet_kernel, margin=float(margin), batch=B, block_rows=tb,
        tiles_per_shard=tiles_per_shard, need_mask=need_mask)

    cost = pl.CostEstimate(
        flops=10 * B * D,
        transcendentals=2 * B,
        bytes_accessed=3 * B * D * itemsize + shards * 8 * 128 * 4)

    out = pl.pallas_call(
        kernel,
        out_shape=jax.ShapeDtypeStruct((shards, 8, 128), jnp.float32),
        grid_spec=pltpu.PrefetchScalarGridSpec(
            num_scalar_prefetch=0,
            grid=(shards, tiles_per_shard),
            in_specs=[
                pl.BlockSpec((tb, D), in_idx),
                pl.BlockSpec((tb, D), in_idx),
                pl.BlockSpec((tb, D), in_idx),
            ],
            out_specs=pl.BlockSpec((1, 8, 128), lambda c, t: (c, 0, 0)),
            scratch_shapes=[pltpu.SMEM((1,), jnp.float32)],
        ),
        compiler_params=pltpu.CompilerParams(
            dimension_semantics=("parallel", "arbitrary"),
            vmem_limit_bytes=vmem_limit,
        ),
        cost_estimate=cost,
    )(anchor, positive, negative)

    return jnp.sum(out[:, 0, 0]) / jnp.float32(B)


def _reference(anchor, positive, negative, margin):
    pos = jnp.sqrt(jnp.sum((anchor - positive + _PDIST_EPS) ** 2, axis=-1))
    neg = jnp.sqrt(jnp.sum((anchor - negative + _PDIST_EPS) ** 2, axis=-1))
    return jnp.mean(jnp.maximum(margin + pos - neg, 0.0))


if __name__ == "__main__":
    key = jax.random.PRNGKey(0)
    k1, k2, k3 = jax.random.split(key, 3)

    # Small embedding batch consistent with the module's forward.
    B, D = 8, 32
    margin = 0.5

    anchor = jax.random.normal(k1, (B, D), dtype=jnp.float32)
    positive = jax.random.normal(k2, (B, D), dtype=jnp.float32)
    negative = jax.random.normal(k3, (B, D), dtype=jnp.float32)

    loss = triplet_loss(anchor, positive, negative, margin)
    jax.block_until_ready(loss)
    ref = _reference(anchor, positive, negative, margin)
    assert jnp.allclose(loss, ref, rtol=1e-5, atol=1e-6), (loss, ref)

    # Exercise the multi-tile / multi-shard / ragged-last-tile path explicitly.
    k4, k5, k6 = jax.random.split(jax.random.PRNGKey(1), 3)
    B2 = 20
    a2 = jax.random.normal(k4, (B2, D), dtype=jnp.float32)
    p2 = jax.random.normal(k5, (B2, D), dtype=jnp.float32)
    n2 = jax.random.normal(k6, (B2, D), dtype=jnp.float32)
    loss2 = triplet_loss(a2, p2, n2, margin, block_rows=8)
    jax.block_until_ready(loss2)
    ref2 = _reference(a2, p2, n2, margin)
    assert jnp.allclose(loss2, ref2, rtol=1e-5, atol=1e-6), (loss2, ref2)

    print("KERNEL_OK")
</pallas_src>

<mosaic_0001>
module attributes {stable_mosaic.version = 11 : i64} {
  func.func @_triplet_kernel(%arg0: i32, %arg1: i32, %arg2: memref<8x32xf32, #tpu.memory_space<vmem>>, %arg3: memref<8x32xf32, #tpu.memory_space<vmem>>, %arg4: memref<8x32xf32, #tpu.memory_space<vmem>>, %arg5: memref<1x8x128xf32, #tpu.memory_space<vmem>>, %arg6: memref<1xf32, #tpu.memory_space<smem>>) attributes {dimension_semantics = [#tpu.dimension_semantics<parallel>, #tpu.dimension_semantics<arbitrary>], iteration_bounds = array<i64: 1, 1>, scalar_prefetch = 0 : i64, scratch_operands = 1 : i64, tpu.core_type = #tpu.core_type<tc>, window_params = [{transform_indices = @transform_0, window_bounds = array<i64: 8, 32>}, {transform_indices = @transform_1, window_bounds = array<i64: 8, 32>}, {transform_indices = @transform_2, window_bounds = array<i64: 8, 32>}, {transform_indices = @transform_3, window_bounds = array<i64: 1, 8, 128>}]} {
    %c0_i32 = arith.constant 0 : i32
    %0 = arith.cmpi eq, %arg1, %c0_i32 : i32
    %1 = arith.extui %0 : i1 to i32
    %c0_i32_0 = arith.constant 0 : i32
    %2 = arith.cmpi ne, %1, %c0_i32_0 : i32
    scf.if %2 {
      %cst_16 = arith.constant 0.000000e+00 : f32
      %c0_17 = arith.constant 0 : index
      %35 = memref.load %arg6[%c0_17] : memref<1xf32, #tpu.memory_space<smem>>
      memref.store %cst_16, %arg6[%c0_17] : memref<1xf32, #tpu.memory_space<smem>>
    } else {
    }
    %c0 = arith.constant 0 : index
    %c0_1 = arith.constant 0 : index
    %3 = vector.load %arg2[%c0, %c0_1] : memref<8x32xf32, #tpu.memory_space<vmem>>, vector<8x32xf32>
    %c0_2 = arith.constant 0 : index
    %c0_3 = arith.constant 0 : index
    %4 = vector.load %arg3[%c0_2, %c0_3] : memref<8x32xf32, #tpu.memory_space<vmem>>, vector<8x32xf32>
    %5 = arith.subf %3, %4 : vector<8x32xf32>
    %cst = arith.constant 9.99999997E-7 : f32
    %6 = vector.broadcast %cst : f32 to vector<8x32xf32>
    %7 = arith.addf %5, %6 : vector<8x32xf32>
    %c0_4 = arith.constant 0 : index
    %c0_5 = arith.constant 0 : index
    %8 = vector.load %arg4[%c0_4, %c0_5] : memref<8x32xf32, #tpu.memory_space<vmem>>, vector<8x32xf32>
    %9 = arith.subf %3, %8 : vector<8x32xf32>
    %cst_6 = arith.constant 9.99999997E-7 : f32
    %10 = vector.broadcast %cst_6 : f32 to vector<8x32xf32>
    %11 = arith.addf %9, %10 : vector<8x32xf32>
    %12 = arith.mulf %7, %7 : vector<8x32xf32>
    %cst_7 = arith.constant dense<0.000000e+00> : vector<8xf32>
    %13 = vector.multi_reduction <add>, %12, %cst_7 [1] : vector<8x32xf32> to vector<8xf32>
    %14 = vector.shape_cast %13 : vector<8xf32> to vector<8x1xf32>
    %15 = math.sqrt %14 : vector<8x1xf32>
    %16 = arith.mulf %11, %11 : vector<8x32xf32>
    %cst_8 = arith.constant dense<0.000000e+00> : vector<8xf32>
    %17 = vector.multi_reduction <add>, %16, %cst_8 [1] : vector<8x32xf32> to vector<8xf32>
    %18 = vector.shape_cast %17 : vector<8xf32> to vector<8x1xf32>
    %19 = math.sqrt %18 : vector<8x1xf32>
    %cst_9 = arith.constant 5.000000e-01 : f32
    %20 = vector.broadcast %cst_9 : f32 to vector<8x1xf32>
    %21 = arith.addf %20, %15 : vector<8x1xf32>
    %22 = arith.subf %21, %19 : vector<8x1xf32>
    %cst_10 = arith.constant 0.000000e+00 : f32
    %23 = vector.broadcast %cst_10 : f32 to vector<8x1xf32>
    %24 = arith.maximumf %22, %23 : vector<8x1xf32>
    %c0_11 = arith.constant 0 : index
    %25 = memref.load %arg6[%c0_11] : memref<1xf32, #tpu.memory_space<smem>>
    %26 = vector.shape_cast %24 : vector<8x1xf32> to vector<1x8x1xf32>
    %cst_12 = arith.constant dense<0.000000e+00> : vector<1xf32>
    %27 = vector.multi_reduction <add>, %26, %cst_12 [1, 2] : vector<1x8x1xf32> to vector<1xf32>
    %28 = vector.shape_cast %27 : vector<1xf32> to vector<1x1x1xf32>
    %29 = vector.extract %28[0, 0, 0] : f32 from vector<1x1x1xf32>
    %30 = arith.addf %25, %29 : f32
    %c0_13 = arith.constant 0 : index
    %31 = memref.load %arg6[%c0_13] : memref<1xf32, #tpu.memory_space<smem>>
    memref.store %30, %arg6[%c0_13] : memref<1xf32, #tpu.memory_space<smem>>
    %c0_i32_14 = arith.constant 0 : i32
    %32 = arith.cmpi eq, %arg1, %c0_i32_14 : i32
    %33 = arith.extui %32 : i1 to i32
    %c0_i32_15 = arith.constant 0 : i32
    %34 = arith.cmpi ne, %33, %c0_i32_15 : i32
    scf.if %34 {
      %c0_16 = arith.constant 0 : index
      %35 = memref.load %arg6[%c0_16] : memref<1xf32, #tpu.memory_space<smem>>
      %36 = vector.broadcast %35 : f32 to vector<1x8x128xf32>
      %c0_17 = arith.constant 0 : index
      %c0_18 = arith.constant 0 : index
      %c0_19 = arith.constant 0 : index
      %37 = vector.load %arg5[%c0_17, %c0_18, %c0_19] : memref<1x8x128xf32, #tpu.memory_space<vmem>>, vector<1x8x128xf32>
      tpu.vector_store %arg5[%c0_17, %c0_18, %c0_19], %36 {strides = array<i32>} : memref<1x8x128xf32, #tpu.memory_space<vmem>>, vector<1x8x128xf32>,
    } else {
    }
    return
  }
  func.func @transform_0(%arg0: i32, %arg1: i32) -> (i32, i32) {
    %c1_i32 = arith.constant 1 : i32
    %0 = arith.muli %arg0, %c1_i32 : i32
    %1 = arith.addi %0, %arg1 : i32
    %c0_i32 = arith.constant 0 : i32
    %2 = arith.minsi %1, %c0_i32 : i32
    %c0_i32_0 = arith.constant 0 : i32
    %c0_i32_1 = arith.constant 0 : i32
    return %2, %c0_i32_0 : i32, i32
  }
  func.func @transform_1(%arg0: i32, %arg1: i32) -> (i32, i32) {
    %c1_i32 = arith.constant 1 : i32
    %0 = arith.muli %arg0, %c1_i32 : i32
    %1 = arith.addi %0, %arg1 : i32
    %c0_i32 = arith.constant 0 : i32
    %2 = arith.minsi %1, %c0_i32 : i32
    %c0_i32_0 = arith.constant 0 : i32
    %c0_i32_1 = arith.constant 0 : i32
    return %2, %c0_i32_0 : i32, i32
  }
  func.func @transform_2(%arg0: i32, %arg1: i32) -> (i32, i32) {
    %c1_i32 = arith.constant 1 : i32
    %0 = arith.muli %arg0, %c1_i32 : i32
    %1 = arith.addi %0, %arg1 : i32
    %c0_i32 = arith.constant 0 : i32
    %2 = arith.minsi %1, %c0_i32 : i32
    %c0_i32_0 = arith.constant 0 : i32
    %c0_i32_1 = arith.constant 0 : i32
    return %2, %c0_i32_0 : i32, i32
  }
  func.func @transform_3(%arg0: i32, %arg1: i32) -> (i32, i32, i32) {
    %c0_i32 = arith.constant 0 : i32
    %c0_i32_0 = arith.constant 0 : i32
    %c0_i32_1 = arith.constant 0 : i32
    return %arg0, %c0_i32, %c0_i32_0 : i32, i32, i32
  }
}

</mosaic_0001>

<llo_original>
// kernel: tpu_custom_call.1
$region0: #{tpu_custom_call.1}
  #allocation0 [shape = 'u32[]', space=smem, size = 0x4, offset = 0x4, fixed_abs, tag = 'smem constant byte address 0x4 - core index']
  #allocation1 [shape = 'u32[144,128]{1,0:T(1,128)}', space=vmem, size = 0x12000, scoped, tag = 'internal scratch']
  #allocation2 [shape = 'f32[1]{0:T(128)}', space=smem, size = 0x200, scoped, tag = 'scratch operand']
  %s0 = inlined_call_operand.hbm [shape: f32[8,32], index: 0, kind: input, shape index: {}]
  %s1 = inlined_call_operand.hbm [shape: f32[8,32], index: 1, kind: input, shape index: {}]
  %s2 = inlined_call_operand.hbm [shape: f32[8,32], index: 2, kind: input, shape index: {}]
  %s3 = inlined_call_operand.hbm [shape: f32[1,8,128], index: 3, kind: output, shape index: {}]
  %s4 = sld [smem:[#allocation0]]
  $region42: #{tpu_custom_call.1} parent=0
    _
  %s6 = ssub.s32 1, %s4
  %s7 = scalar_select 0, %s6, %s4
  $region1: #{tpu_custom_call.1} parent=0
    #allocation3 [shape = 'u8[4096]{0}', space=vmem, size = 0x1000, scoped, tag = 'input window, operand 0, single buffered']
    #allocation4 [shape = 's32[1]{0}', space=sflag, size = 0x4, scoped, tag = 'scoped memory for tpu_custom_call.1']
    #allocation5 [shape = 's32[1]{0}', space=sflag, size = 0x4, scoped, tag = 'scoped memory for tpu_custom_call.1']
    #allocation6 [shape = 'u8[4096]{0}', space=vmem, size = 0x1000, scoped, tag = 'input window, operand 1, single buffered']
    #allocation7 [shape = 's32[1]{0}', space=sflag, size = 0x4, scoped, tag = 'scoped memory for tpu_custom_call.1']
    #allocation8 [shape = 'u8[4096]{0}', space=vmem, size = 0x1000, scoped, tag = 'input window, operand 2, single buffered']
    #allocation9 [shape = 'u8[4096]{0}', space=vmem, size = 0x1000, scoped, tag = 'output window, operand 0, single buffered']
    %8 = vsyncpa [#allocation4], 0
    %9 = vsyncpa [#allocation7], 0
    %10 = vsyncpa [#allocation5], 0
    // Predicated region
    $region2: #{tpu_custom_call.1} parent=1 // pred_check
      _
    $region3: #{tpu_custom_call.1} parent=1 // pred_check_branch
      %12 = sbr.rel (0) target = $region5
    $region4: #{tpu_custom_call.1} parent=1 // pred_region
      %s13 = sadd.s32 0, 0
      %p14 = scmp.lt.s32.totalorder %s13, 0
      %s15 = scalar_select %p14, %s13, 0
      %s17 = ssub.s32 128, 128
      %18 = vsyncadd [#allocation4], %s17
      %s19 = smul.addr %s15, 128
      %s20 = scalar_lea.hbm %s0, %s19
      %s22 = sshll.u32 [#allocation3], 4
      %s23 = int_to_ptr.vmem [resolvable:$true] %s22
      %25 = dma.hbm_to_vmem [thread:$0]  %s20, 128, %s23, [#allocation4]
    $region5: #{tpu_custom_call.1} parent=1 // pred_fallthru
      _
    // Predicated region
    $region6: #{tpu_custom_call.1} parent=1 // pred_check
      _
    $region7: #{tpu_custom_call.1} parent=1 // pred_check_branch
      %27 = sbr.rel (0) target = $region9
    $region8: #{tpu_custom_call.1} parent=1 // pred_region
      %s28 = sadd.s32 0, 0
      %p29 = scmp.lt.s32.totalorder %s28, 0
      %s30 = scalar_select %p29, %s28, 0
      %s32 = ssub.s32 128, 128
      %33 = vsyncadd [#allocation7], %s32
      %s34 = smul.addr %s30, 128
      %s35 = scalar_lea.hbm %s1, %s34
      %s37 = sshll.u32 [#allocation6], 4
      %s38 = int_to_ptr.vmem [resolvable:$true] %s37
      %40 = dma.hbm_to_vmem [thread:$0]  %s35, 128, %s38, [#allocation7]
    $region9: #{tpu_custom_call.1} parent=1 // pred_fallthru
      _
    // Predicated region
    $region10: #{tpu_custom_call.1} parent=1 // pred_check
      _
    $region11: #{tpu_custom_call.1} parent=1 // pred_check_branch
      %42 = sbr.rel (0) target = $region13
    $region12: #{tpu_custom_call.1} parent=1 // pred_region
      %s43 = sadd.s32 0, 0
      %p44 = scmp.lt.s32.totalorder %s43, 0
      %s45 = scalar_select %p44, %s43, 0
      %s47 = ssub.s32 128, 128
      %48 = vsyncadd [#allocation7], %s47
      %s49 = smul.addr %s45, 128
      %s50 = scalar_lea.hbm %s2, %s49
      %s52 = sshll.u32 [#allocation8], 4
      %s53 = int_to_ptr.vmem [resolvable:$true] %s52
      %55 = dma.hbm_to_vmem [thread:$0]  %s50, 128, %s53, [#allocation7]
    $region13: #{tpu_custom_call.1} parent=1 // pred_fallthru
      _
    // Predicated region
    $region14: #{tpu_custom_call.1} parent=1 // pred_check
      _
    $region15: #{tpu_custom_call.1} parent=1 // pred_check_branch
      %57 = sbr.rel (0) target = $region17
    $region16: #{tpu_custom_call.1} parent=1 // pred_region
      %58 = dma.done [#allocation4], 128
    $region17: #{tpu_custom_call.1} parent=1 // pred_fallthru
      _
    // Predicated region
    $region18: #{tpu_custom_call.1} parent=1 // pred_check
      _
    $region19: #{tpu_custom_call.1} parent=1 // pred_check_branch
      %60 = sbr.rel (0) target = $region21
    $region20: #{tpu_custom_call.1} parent=1 // pred_region
      %61 = dma.done [#allocation7], 128
    $region21: #{tpu_custom_call.1} parent=1 // pred_fallthru
      _
    // Predicated region
    $region22: #{tpu_custom_call.1} parent=1 // pred_check
      _
    $region23: #{tpu_custom_call.1} parent=1 // pred_check_branch
      %63 = sbr.rel (0) target = $region25
    $region24: #{tpu_custom_call.1} parent=1 // pred_region
      %64 = dma.done [#allocation7], 128
    $region25: #{tpu_custom_call.1} parent=1 // pred_fallthru
      _
    %s65 = sadd.s32 0, 0
    %p66 = scmp.lt.s32.totalorder %s65, 0
    %s67 = scalar_select %p66, %s65, 0
    %s68 = sadd.s32 0, 0
    %p69 = scmp.lt.s32.totalorder %s68, 0
    %s70 = scalar_select %p69, %s68, 0
    %s71 = sadd.s32 0, 0
    %p72 = scmp.lt.s32.totalorder %s71, 0
    %s73 = scalar_select %p72, %s71, 0
    %p74 = scmp.eq.s32.totalorder 0, 0
    // Predicated region
    $region26: #{tpu_custom_call.1} parent=1 // pred_check
      %p75 = pneg %p74
    $region27: #{tpu_custom_call.1} parent=1 // pred_check_branch
      %77 = sbr.rel (%p75) target = $region29
    $region28: #{tpu_custom_call.1} parent=1 // pred_region
      %s78 = scalar_lea.smem [#allocation2], 0
      %79 = sst [smem:[%s78]] 0.0
    $region29: #{tpu_custom_call.1} parent=1 // pred_fallthru
      _
    %v80 = vld [vmem:[#allocation3] sm:$0xff]
    %v81 = vld [vmem:[#allocation6] sm:$0xff]
    %v82 = vsub.f32 %v80, %v81
    %v83 = vadd.f32 %v82, 1e-06
    %v84 = vld [vmem:[#allocation8] sm:$0xff]
    %v85 = vsub.f32 %v80, %v84
    %v86 = vadd.f32 %v85, 1e-06
    %v87 = vmul.f32 %v83, %v83
    %vm88 = vcmask 261120
    %v89 = vsel %vm88, %v87, 0.0
    %90 = vadd.xlane.f32.xlu0 %v89
    %v91 = vpop.xlane.xlu0 %90
    %v92 = vrsqrt.pop %v91
    %v93 = vmul.f32 %v91, %v92
    %vm94 = vcmp.eq.f32.partialorder %v91, inf
    %v95 = vsel %vm94, %v91, %v93
    %vm96 = vcmp.eq.f32.partialorder %v91, 0.0
    %v97 = vand.u32 %v91, 2147483648
    %v98 = vsel %vm96, %v97, %v95
    %v99 = vmul.f32 %v86, %v86
    %v100 = vsel %vm88, %v99, 0.0
    %101 = vadd.xlane.f32.xlu0 %v100
    %v102 = vpop.xlane.xlu0 %101
    %v103 = vrsqrt.pop %v102
    %v104 = vmul.f32 %v102, %v103
    %vm105 = vcmp.eq.f32.partialorder %v102, inf
    %v106 = vsel %vm105, %v102, %v104
    %vm107 = vcmp.eq.f32.partialorder %v102, 0.0
    %v108 = vand.u32 %v102, 2147483648
    %v109 = vsel %vm107, %v108, %v106
    %v110 = vadd.f32 %v98, 0.5
    %v111 = vsub.f32 %v110, %v109
    %v112 = vmax.f32 %v111, 0.0
    %s113 = sld [smem:[#allocation2]]
    %vm114 = vcmask 7168
    %v115 = vsel %vm114, %v112, 0.0
    %116 = vadd.xlane.f32.xlu0 %v115
    %v117 = vpop.xlane.xlu0 %116
    %v118 = vrot.slane %v117, 4
    %v119 = vadd.f32 %v117, %v118
    %v120 = vrot.slane %v119, 2
    %v121 = vadd.f32 %v119, %v120
    %v122 = vrot.slane %v121, 1
    %v123 = vadd.f32 %v121, %v122
    %s124 = vtos %v123
    %s125 = sadd.f32 %s113, %s124
    %s126 = scalar_lea.smem [#allocation2], 0
    %127 = sst [smem:[%s126]] %s125
    // Predicated region
    $region30: #{tpu_custom_call.1} parent=1 // pred_check
      %p128 = pneg %p74
    $region31: #{tpu_custom_call.1} parent=1 // pred_check_branch
      %130 = sbr.rel (%p128) target = $region33
    $region32: #{tpu_custom_call.1} parent=1 // pred_region
      %s131 = sld [smem:[#allocation2]]
      %v132 = vstv %s131
      %133 = vst [vmem:[#allocation9] sm:$0xff] %v132
    $region33: #{tpu_custom_call.1} parent=1 // pred_fallthru
      _
    // Predicated region
    $region34: #{tpu_custom_call.1} parent=1 // pred_check
      _
    $region35: #{tpu_custom_call.1} parent=1 // pred_check_branch
      %135 = sbr.rel (0) target = $region37
    $region36: #{tpu_custom_call.1} parent=1 // pred_region
      %s137 = ssub.s32 128, 128
      %138 = vsyncadd [#allocation5], %s137
      %s140 = sshll.u32 [#allocation9], 4
      %s141 = int_to_ptr.vmem [resolvable:$true] %s140
      %143 = dma.vmem_to_hbm [thread:$0]  %s141, 128, %s3, [#allocation5]
    $region37: #{tpu_custom_call.1} parent=1 // pred_fallthru
      _
    // Predicated region
    $region38: #{tpu_custom_call.1} parent=1 // pred_check
      _
    $region39: #{tpu_custom_call.1} parent=1 // pred_check_branch
      %145 = sbr.rel (0) target = $region41
    $region40: #{tpu_custom_call.1} parent=1 // pred_region
      %146 = dma.done [#allocation5], 128
    $region41: #{tpu_custom_call.1} parent=1 // pred_fallthru
      _
    %147 = vsyncpa [#allocation4], 1
    %148 = vsyncpa [#allocation7], 1
    %149 = vsyncpa [#allocation5], 1

</llo_original>
